<compile_context>
chip_gen: v7x
topology: tpu7x:2x2x1
jax: 0.10.0
libtpu: 0.0.40
codegen_flags: <defaults>
</compile_context>

<pallas_src>
import functools

import jax
import jax.numpy as jnp
from jax import lax
from jax.experimental import pallas as pl
from jax.experimental.pallas import tpu as pltpu

IGNORE_INDEX = 255
NEG_BIG = -1.0e9  # padded-class bias: exp() underflows to 0, stays finite under /T


def _vmem_capacity_bytes():
    try:
        info = pltpu.get_tpu_info()
        cap = getattr(info, "vmem_capacity_bytes", None)
        if cap:
            return int(cap)
    except Exception:
        pass
    return 64 * 1024 * 1024  # conservative (v7x physical) fallback


def _pick_tile(hw_pad, cin, c_pad, in_bytes):
    """Largest pixel-tile (lane axis) that divides hw_pad and fits a conservative
    VMEM budget derived from the actual Cin / C_pad / dtype sizes."""
    cap = _vmem_capacity_bytes()
    budget = cap // 2  # leave headroom for the compiler / double buffering slack

    def need(tp):
        feats = 2 * cin * tp * in_bytes              # double-buffered bf16 features
        labels = 2 * 1 * tp * 4                      # int32 labels
        logits = 3 * c_pad * tp * 4                  # fused (3*C_pad, TP) f32 logits
        live = 10 * c_pad * tp * 4                   # softmax / KL intermediates
        preds = 2 * tp * 4                           # int32 predictions
        weights = 2 * (3 * c_pad * cin * in_bytes + 3 * c_pad * 4)
        fixed = 4 * 8 * 128 * 4                      # partials block + slack
        return feats + labels + logits + live + preds + weights + fixed

    for tp in (8192, 4096, 2048, 1024, 512, 256, 128):
        if hw_pad % tp == 0 and need(tp) <= budget:
            return tp, need(tp), cap
    return 128, need(128), cap


# ----------------------------------------------------------------------------
# Fused kernel: one (3*C_pad, Cin)x(Cin, TP) head matmul + distillation losses
# + argmax, one pixel tile per grid step.
#   x_ref     : (Cin, TP)      bf16  input features, pixels on the lane axis
#   truth_ref : (1, TP)        int32 labels (255 == ignore)
#   w_ref     : (3*C_pad, Cin) bf16  packed head weights (student|aux|teacher)
#   b_ref     : (3*C_pad, 1)   f32   packed head biases (padded rows = -1e9)
#   pred_ref  : (1, TP)        int32 argmax over classes (lane-dense store)
#   part_ref  : (8, 128)       f32   per-batch partial sums (resident across t):
#                 row0 = sum q*(logq - logp)          (KL numerator)
#                 row1 = sum lse(s) - s[truth]        (student CE numerator)
#                 row2 = same for aux head
#                 row3 = number of valid (non-ignored) pixels
# ----------------------------------------------------------------------------
def _kdnet_kernel(x_ref, truth_ref, w_ref, b_ref, pred_ref, part_ref, *,
                  c_pad, temperature, hw_valid, tile_pixels, mask_pixels):
    t_idx = pl.program_id(1)
    T = float(temperature)
    Cp = c_pad
    TP = tile_pixels

    x = x_ref[...]                                   # (Cin, TP) bf16
    # ONE fused MXU push for all three heads (sublane-aligned slices below).
    logits = jnp.dot(w_ref[...], x,
                     preferred_element_type=jnp.float32) + b_ref[...]  # (3Cp, TP) f32
    s = logits[0:Cp, :]                              # student
    a = logits[Cp:2 * Cp, :]                         # aux
    tch = logits[2 * Cp:3 * Cp, :]                   # teacher

    def lse(z):                                      # (Cp, TP) -> (1, TP)
        m = jnp.max(z, axis=0, keepdims=True)
        return m + jnp.log(jnp.sum(jnp.exp(z - m), axis=0, keepdims=True))

    # KL(q || exp(logp)) pieces: p = log_softmax(student/T), q = softmax(teacher/T)
    if T == 1.0:
        s_T, t_T = s, tch
    else:
        inv_T = jnp.float32(1.0 / T)
        s_T, t_T = s * inv_T, tch * inv_T
    lse_sT = lse(s_T)
    lse_tT = lse(t_T)
    logp = s_T - lse_sT
    logq = t_T - lse_tT
    q = jnp.exp(logq)
    kl_px = jnp.sum(q * (logq - logp), axis=0, keepdims=True)   # (1, TP)

    truth = truth_ref[...]                           # (1, TP) int32
    valid = truth != IGNORE_INDEX
    if mask_pixels:
        # Mask out spatial padding pixels (labels are already IGNORE there, so
        # only the KL term needs this mask).
        pix = lax.broadcasted_iota(jnp.int32, (1, TP), 1) + t_idx * TP
        kl_px = jnp.where(pix < hw_valid, kl_px, 0.0)
    kl_sum = jnp.sum(kl_px)

    cls_idx = lax.broadcasted_iota(jnp.int32, (Cp, TP), 0)
    onehot = cls_idx == truth                        # (Cp, TP)

    def ce_partial(z, lse_z):
        # cross-entropy numerator: sum over valid pixels of lse(z) - z[truth];
        # no full (Cp, TP) log_softmax materialization needed.
        picked = jnp.sum(jnp.where(onehot, z, 0.0), axis=0, keepdims=True)
        return jnp.sum(jnp.where(valid, lse_z - picked, 0.0))

    lse_s = lse_sT if T == 1.0 else lse(s)           # raw-logit lse (reuse if T==1)
    ce_sum = ce_partial(s, lse_s)
    aux_sum = ce_partial(a, lse(a))
    n_valid = jnp.sum(valid.astype(jnp.float32))

    # student_output.max(1)[1]: first maximal class index (min-index tie-break).
    s_max = jnp.max(s, axis=0, keepdims=True)
    cand = jnp.where(s == s_max, cls_idx, jnp.int32(Cp))
    pred_ref[...] = jnp.min(cand, axis=0, keepdims=True)

    # Accumulate the four scalar partials into the (resident) (8, 128) output
    # block; written back to HBM only once per batch element.
    row = lax.broadcasted_iota(jnp.int32, (8, 128), 0)
    packed = jnp.where(
        row == 0, kl_sum,
        jnp.where(row == 1, ce_sum,
                  jnp.where(row == 2, aux_sum,
                            jnp.where(row == 3, n_valid, 0.0))))

    @pl.when(t_idx == 0)
    def _():
        part_ref[...] = packed

    @pl.when(t_idx != 0)
    def _():
        part_ref[...] += packed


def _kdnet_pallas(x, truth, w2d, b2d, *, c_pad, temperature, tile_pixels,
                  hw_valid, mask_pixels, vmem_limit_bytes):
    N, cin, hw_pad = x.shape
    TP = tile_pixels
    num_tiles = hw_pad // TP
    rows = w2d.shape[0]  # 3 * c_pad
    kernel = functools.partial(
        _kdnet_kernel, c_pad=c_pad, temperature=float(temperature),
        hw_valid=hw_valid, tile_pixels=TP, mask_pixels=mask_pixels)
    return pl.pallas_call(
        kernel,
        grid=(N, num_tiles),
        in_specs=[
            pl.BlockSpec((None, cin, TP), lambda n, t: (n, 0, t)),   # bf16 features
            pl.BlockSpec((None, 1, TP), lambda n, t: (n, 0, t)),     # int32 labels
            pl.BlockSpec((rows, cin), lambda n, t: (0, 0)),          # packed weights
            pl.BlockSpec((rows, 1), lambda n, t: (0, 0)),            # packed biases
        ],
        out_specs=(
            pl.BlockSpec((None, 1, TP), lambda n, t: (n, 0, t)),     # predictions
            pl.BlockSpec((None, 8, 128), lambda n, t: (n, 0, 0)),    # resident partials
        ),
        out_shape=(
            jax.ShapeDtypeStruct((N, 1, hw_pad), jnp.int32),
            jax.ShapeDtypeStruct((N, 8, 128), jnp.float32),
        ),
        compiler_params=pltpu.CompilerParams(
            dimension_semantics=("parallel", "arbitrary"),
            vmem_limit_bytes=vmem_limit_bytes),
    )(x, truth, w2d, b2d)


# ----------------------------------------------------------------------------
# KDNet wrapper (training-mode forward):
#   forward(img, gTruth) -> (argmax(N,H,W), main_loss, aux_loss, kl_loss, ce_loss)
# ----------------------------------------------------------------------------
class KDNetPallas:
    def __init__(self, in_channels=4, classes=2, temperature=1.0, alpha=0.0):
        assert classes > 1
        self.classes = classes
        self.in_channels = in_channels
        self.temperature = float(temperature)
        self.alpha = float(alpha)
        self.c_pad = ((classes + 7) // 8) * 8        # sublane-aligned class count

        # Deterministic synthetic parameters for the stand-in heads
        # (head 0 = student, 1 = aux, 2 = teacher).
        key = jax.random.PRNGKey(0)
        kw, kb = jax.random.split(key)
        w_all = (0.1 * jax.random.normal(
            kw, (3, classes, in_channels))).astype(jnp.float32)
        b_all = (0.1 * jax.random.normal(
            kb, (3, classes, 1))).astype(jnp.float32)

        # Pack the three heads into one (3*C_pad, Cin) matrix; padded class rows
        # get zero weights and a huge negative bias so they never affect
        # softmax / KL / CE / argmax.
        w_pad = jnp.zeros((3, self.c_pad, in_channels), jnp.float32)
        w_pad = w_pad.at[:, :classes, :].set(w_all)
        b_pad = jnp.full((3, self.c_pad, 1), NEG_BIG, jnp.float32)
        b_pad = b_pad.at[:, :classes, :].set(b_all)
        self.w2d = w_pad.reshape(3 * self.c_pad, in_channels).astype(jnp.bfloat16)
        self.b2d = b_pad.reshape(3 * self.c_pad, 1).astype(jnp.float32)

    def forward(self, img, gTruth):
        # img: (N, Cin, H, W) float (NCHW, as in PyTorch); gTruth: (N, H, W) int.
        N, Cin, H, W = img.shape
        assert Cin == self.in_channels
        HW = H * W
        hw_pad = ((HW + 127) // 128) * 128           # lane-aligned pixel count

        # Free reshapes only — no NHWC transpose copy in HBM.  Features in bf16.
        x = img.reshape(N, Cin, HW).astype(jnp.bfloat16)
        truth = gTruth.reshape(N, 1, HW).astype(jnp.int32)
        if hw_pad > HW:
            pad = hw_pad - HW
            x = jnp.pad(x, ((0, 0), (0, 0), (0, pad)))
            truth = jnp.pad(truth, ((0, 0), (0, 0), (0, pad)),
                            constant_values=IGNORE_INDEX)

        TP, vmem_need, vmem_cap = _pick_tile(hw_pad, Cin, self.c_pad, in_bytes=2)
        vmem_limit = int(min(0.9 * vmem_cap,
                             max(2 * vmem_need, 32 * 1024 * 1024)))

        pred, parts = _kdnet_pallas(
            x, truth, self.w2d, self.b2d,
            c_pad=self.c_pad, temperature=self.temperature, tile_pixels=TP,
            hw_valid=HW, mask_pixels=(hw_pad != HW),
            vmem_limit_bytes=vmem_limit)

        # Global reductions / normalization of the per-batch partials (tiny).
        kl_sum = jnp.sum(parts[:, 0, 0])
        ce_sum = jnp.sum(parts[:, 1, 0])
        aux_sum = jnp.sum(parts[:, 2, 0])
        n_valid = jnp.sum(parts[:, 3, 0])

        T = jnp.float32(self.temperature)
        # F.kl_div(reduction='mean') divides by the total element count N*C*H*W.
        kl_loss = kl_sum / jnp.float32(N * HW * self.classes) * T * T * 2.0
        # NOTE: matches torch.nn.functional.cross_entropy semantics, including
        # NaN if every pixel carries ignore_index.
        ce_loss = ce_sum / n_valid
        aux_loss = aux_sum / n_valid
        alpha = jnp.float32(self.alpha)
        main_loss = kl_loss * (1.0 - alpha) + ce_loss * alpha

        pred = pred.reshape(N, hw_pad)[:, :HW].reshape(N, H, W)
        return pred, main_loss, aux_loss, kl_loss, ce_loss


if __name__ == "__main__":
    # Small deterministic inputs: batch=2, channels=4, spatial=16x16, classes=2.
    key = jax.random.PRNGKey(0)
    k_img, k_lbl, k_ign = jax.random.split(key, 3)
    N, Cin, H, W, classes = 2, 4, 16, 16, 2

    img = jax.random.normal(k_img, (N, Cin, H, W), dtype=jnp.float32)
    labels = jax.random.randint(k_lbl, (N, H, W), 0, classes, dtype=jnp.int32)
    # sprinkle some ignore_index=255 pixels to exercise the CE masking
    ignore_mask = jax.random.uniform(k_ign, (N, H, W)) < 0.1
    gTruth = jnp.where(ignore_mask, jnp.int32(IGNORE_INDEX), labels)

    model = KDNetPallas(in_channels=Cin, classes=classes, temperature=1.0, alpha=0.0)
    pred, main_loss, aux_loss, kl_loss, ce_loss = model.forward(img, gTruth)
    jax.block_until_ready((pred, main_loss, aux_loss, kl_loss, ce_loss))

    assert pred.shape == (N, H, W) and pred.dtype == jnp.int32
    assert jnp.all((pred >= 0) & (pred < classes))
    for v in (main_loss, aux_loss, kl_loss, ce_loss):
        assert jnp.isfinite(v)
    print("KERNEL_OK")
</pallas_src>

<mosaic_0001>
module attributes {stable_mosaic.version = 11 : i64} {
  func.func @_kdnet_kernel(%arg0: i32, %arg1: i32, %arg2: memref<1x4x256xbf16, #tpu.memory_space<vmem>>, %arg3: memref<1x1x256xi32, #tpu.memory_space<vmem>>, %arg4: memref<24x4xbf16, #tpu.memory_space<vmem>>, %arg5: memref<24x1xf32, #tpu.memory_space<vmem>>, %arg6: memref<1x1x256xi32, #tpu.memory_space<vmem>>, %arg7: memref<1x8x128xf32, #tpu.memory_space<vmem>>) attributes {dimension_semantics = [#tpu.dimension_semantics<parallel>, #tpu.dimension_semantics<arbitrary>], iteration_bounds = array<i64: 2, 1>, scalar_prefetch = 0 : i64, scratch_operands = 0 : i64, tpu.core_type = #tpu.core_type<tc>, window_params = [{transform_indices = @transform_0, window_bounds = array<i64: 1, 4, 256>}, {transform_indices = @transform_1, window_bounds = array<i64: 1, 1, 256>}, {pipeline_mode = #tpu.pipeline_mode<synchronous>, transform_indices = @transform_2, window_bounds = array<i64: 24, 4>}, {pipeline_mode = #tpu.pipeline_mode<synchronous>, transform_indices = @transform_3, window_bounds = array<i64: 24, 1>}, {transform_indices = @transform_4, window_bounds = array<i64: 1, 1, 256>}, {transform_indices = @transform_5, window_bounds = array<i64: 1, 8, 128>}]} {
    %c0 = arith.constant 0 : index
    %c0_0 = arith.constant 0 : index
    %c0_1 = arith.constant 0 : index
    %0 = vector.load %arg2[%c0, %c0_0, %c0_1] : memref<1x4x256xbf16, #tpu.memory_space<vmem>>, vector<1x4x256xbf16>
    %1 = vector.shape_cast %0 : vector<1x4x256xbf16> to vector<4x256xbf16>
    %c0_2 = arith.constant 0 : index
    %c0_3 = arith.constant 0 : index
    %2 = vector.load %arg4[%c0_2, %c0_3] : memref<24x4xbf16, #tpu.memory_space<vmem>>, vector<24x4xbf16>
    %cst = arith.constant dense<0.000000e+00> : vector<24x256xf32>
    %3 = tpu.matmul %2, %1, %cst {dimension_numbers = #tpu.dot_dimension_numbers<[1], [0], [0], [1], [0, 0, 1, 1], [], []>} : vector<24x4xbf16>, vector<4x256xbf16>, vector<24x256xf32> -> vector<24x256xf32>
    %c0_4 = arith.constant 0 : index
    %c0_5 = arith.constant 0 : index
    %4 = vector.load %arg5[%c0_4, %c0_5] : memref<24x1xf32, #tpu.memory_space<vmem>>, vector<24x1xf32>
    %5 = vector.broadcast %4 : vector<24x1xf32> to vector<24x256xf32>
    %6 = arith.addf %3, %5 : vector<24x256xf32>
    %7 = vector.extract_strided_slice %6 {offsets = [0, 0], sizes = [8, 256], strides = [1, 1]} : vector<24x256xf32> to vector<8x256xf32>
    %8 = vector.extract_strided_slice %6 {offsets = [8, 0], sizes = [8, 256], strides = [1, 1]} : vector<24x256xf32> to vector<8x256xf32>
    %9 = vector.extract_strided_slice %6 {offsets = [16, 0], sizes = [8, 256], strides = [1, 1]} : vector<24x256xf32> to vector<8x256xf32>
    %cst_6 = arith.constant dense<0xFF800000> : vector<256xf32>
    %10 = vector.multi_reduction <maximumf>, %7, %cst_6 [0] : vector<8x256xf32> to vector<256xf32>
    %11 = vector.shape_cast %10 : vector<256xf32> to vector<1x256xf32>
    %12 = vector.broadcast %11 : vector<1x256xf32> to vector<8x256xf32>
    %13 = arith.subf %7, %12 : vector<8x256xf32>
    %14 = math.exp %13 : vector<8x256xf32>
    %cst_7 = arith.constant dense<0.000000e+00> : vector<256xf32>
    %15 = vector.multi_reduction <add>, %14, %cst_7 [0] : vector<8x256xf32> to vector<256xf32>
    %16 = vector.shape_cast %15 : vector<256xf32> to vector<1x256xf32>
    %17 = math.log %16 : vector<1x256xf32>
    %18 = arith.addf %11, %17 : vector<1x256xf32>
    %cst_8 = arith.constant dense<0xFF800000> : vector<256xf32>
    %19 = vector.multi_reduction <maximumf>, %9, %cst_8 [0] : vector<8x256xf32> to vector<256xf32>
    %20 = vector.shape_cast %19 : vector<256xf32> to vector<1x256xf32>
    %21 = vector.broadcast %20 : vector<1x256xf32> to vector<8x256xf32>
    %22 = arith.subf %9, %21 : vector<8x256xf32>
    %23 = math.exp %22 : vector<8x256xf32>
    %cst_9 = arith.constant dense<0.000000e+00> : vector<256xf32>
    %24 = vector.multi_reduction <add>, %23, %cst_9 [0] : vector<8x256xf32> to vector<256xf32>
    %25 = vector.shape_cast %24 : vector<256xf32> to vector<1x256xf32>
    %26 = math.log %25 : vector<1x256xf32>
    %27 = arith.addf %20, %26 : vector<1x256xf32>
    %28 = vector.broadcast %18 : vector<1x256xf32> to vector<8x256xf32>
    %29 = arith.subf %7, %28 : vector<8x256xf32>
    %30 = vector.broadcast %27 : vector<1x256xf32> to vector<8x256xf32>
    %31 = arith.subf %9, %30 : vector<8x256xf32>
    %32 = math.exp %31 : vector<8x256xf32>
    %33 = arith.subf %31, %29 : vector<8x256xf32>
    %34 = arith.mulf %32, %33 : vector<8x256xf32>
    %cst_10 = arith.constant dense<0.000000e+00> : vector<256xf32>
    %35 = vector.multi_reduction <add>, %34, %cst_10 [0] : vector<8x256xf32> to vector<256xf32>
    %36 = vector.shape_cast %35 : vector<256xf32> to vector<1x256xf32>
    %c0_11 = arith.constant 0 : index
    %c0_12 = arith.constant 0 : index
    %c0_13 = arith.constant 0 : index
    %37 = vector.load %arg3[%c0_11, %c0_12, %c0_13] : memref<1x1x256xi32, #tpu.memory_space<vmem>>, vector<1x1x256xi32>
    %38 = vector.shape_cast %37 : vector<1x1x256xi32> to vector<1x256xi32>
    %c255_i32 = arith.constant 255 : i32
    %39 = vector.broadcast %c255_i32 : i32 to vector<1x256xi32>
    %40 = arith.cmpi ne, %38, %39 : vector<1x256xi32>
    %41 = vector.shape_cast %36 : vector<1x256xf32> to vector<1x1x256xf32>
    %cst_14 = arith.constant dense<0.000000e+00> : vector<1xf32>
    %42 = vector.multi_reduction <add>, %41, %cst_14 [1, 2] : vector<1x1x256xf32> to vector<1xf32>
    %43 = vector.shape_cast %42 : vector<1xf32> to vector<1x1x1xf32>
    %44 = vector.extract %43[0, 0, 0] : f32 from vector<1x1x1xf32>
    %45 = tpu.iota {dimensions = array<i32: 0>} : vector<8x256xi32>
    %46 = vector.broadcast %38 : vector<1x256xi32> to vector<8x256xi32>
    %47 = arith.cmpi eq, %45, %46 : vector<8x256xi32>
    %cst_15 = arith.constant 0.000000e+00 : f32
    %48 = vector.broadcast %cst_15 : f32 to vector<8x256xf32>
    %49 = arith.select %47, %7, %48 : vector<8x256xi1>, vector<8x256xf32>
    %cst_16 = arith.constant dense<0.000000e+00> : vector<256xf32>
    %50 = vector.multi_reduction <add>, %49, %cst_16 [0] : vector<8x256xf32> to vector<256xf32>
    %51 = vector.shape_cast %50 : vector<256xf32> to vector<1x256xf32>
    %52 = arith.subf %18, %51 : vector<1x256xf32>
    %cst_17 = arith.constant 0.000000e+00 : f32
    %53 = vector.broadcast %cst_17 : f32 to vector<1x256xf32>
    %54 = arith.select %40, %52, %53 : vector<1x256xi1>, vector<1x256xf32>
    %55 = vector.shape_cast %54 : vector<1x256xf32> to vector<1x1x256xf32>
    %cst_18 = arith.constant dense<0.000000e+00> : vector<1xf32>
    %56 = vector.multi_reduction <add>, %55, %cst_18 [1, 2] : vector<1x1x256xf32> to vector<1xf32>
    %57 = vector.shape_cast %56 : vector<1xf32> to vector<1x1x1xf32>
    %58 = vector.extract %57[0, 0, 0] : f32 from vector<1x1x1xf32>
    %cst_19 = arith.constant dense<0xFF800000> : vector<256xf32>
    %59 = vector.multi_reduction <maximumf>, %8, %cst_19 [0] : vector<8x256xf32> to vector<256xf32>
    %60 = vector.shape_cast %59 : vector<256xf32> to vector<1x256xf32>
    %61 = vector.broadcast %60 : vector<1x256xf32> to vector<8x256xf32>
    %62 = arith.subf %8, %61 : vector<8x256xf32>
    %63 = math.exp %62 : vector<8x256xf32>
    %cst_20 = arith.constant dense<0.000000e+00> : vector<256xf32>
    %64 = vector.multi_reduction <add>, %63, %cst_20 [0] : vector<8x256xf32> to vector<256xf32>
    %65 = vector.shape_cast %64 : vector<256xf32> to vector<1x256xf32>
    %66 = math.log %65 : vector<1x256xf32>
    %67 = arith.addf %60, %66 : vector<1x256xf32>
    %cst_21 = arith.constant 0.000000e+00 : f32
    %68 = vector.broadcast %cst_21 : f32 to vector<8x256xf32>
    %69 = arith.select %47, %8, %68 : vector<8x256xi1>, vector<8x256xf32>
    %cst_22 = arith.constant dense<0.000000e+00> : vector<256xf32>
    %70 = vector.multi_reduction <add>, %69, %cst_22 [0] : vector<8x256xf32> to vector<256xf32>
    %71 = vector.shape_cast %70 : vector<256xf32> to vector<1x256xf32>
    %72 = arith.subf %67, %71 : vector<1x256xf32>
    %cst_23 = arith.constant 0.000000e+00 : f32
    %73 = vector.broadcast %cst_23 : f32 to vector<1x256xf32>
    %74 = arith.select %40, %72, %73 : vector<1x256xi1>, vector<1x256xf32>
    %75 = vector.shape_cast %74 : vector<1x256xf32> to vector<1x1x256xf32>
    %cst_24 = arith.constant dense<0.000000e+00> : vector<1xf32>
    %76 = vector.multi_reduction <add>, %75, %cst_24 [1, 2] : vector<1x1x256xf32> to vector<1xf32>
    %77 = vector.shape_cast %76 : vector<1xf32> to vector<1x1x1xf32>
    %78 = vector.extract %77[0, 0, 0] : f32 from vector<1x1x1xf32>
    %79 = arith.extui %40 : vector<1x256xi1> to vector<1x256xi32>
    %80 = arith.sitofp %79 : vector<1x256xi32> to vector<1x256xf32>
    %81 = vector.shape_cast %80 : vector<1x256xf32> to vector<1x1x256xf32>
    %cst_25 = arith.constant dense<0.000000e+00> : vector<1xf32>
    %82 = vector.multi_reduction <add>, %81, %cst_25 [1, 2] : vector<1x1x256xf32> to vector<1xf32>
    %83 = vector.shape_cast %82 : vector<1xf32> to vector<1x1x1xf32>
    %84 = vector.extract %83[0, 0, 0] : f32 from vector<1x1x1xf32>
    %cst_26 = arith.constant dense<0xFF800000> : vector<256xf32>
    %85 = vector.multi_reduction <maximumf>, %7, %cst_26 [0] : vector<8x256xf32> to vector<256xf32>
    %86 = vector.shape_cast %85 : vector<256xf32> to vector<1x256xf32>
    %87 = vector.broadcast %86 : vector<1x256xf32> to vector<8x256xf32>
    %88 = arith.cmpf oeq, %7, %87 : vector<8x256xf32>
    %c8_i32 = arith.constant 8 : i32
    %89 = vector.broadcast %c8_i32 : i32 to vector<8x256xi32>
    %90 = arith.select %88, %45, %89 : vector<8x256xi1>, vector<8x256xi32>
    %cst_27 = arith.constant dense<2147483647> : vector<256xi32>
    %91 = vector.multi_reduction <minsi>, %90, %cst_27 [0] : vector<8x256xi32> to vector<256xi32>
    %92 = vector.shape_cast %91 : vector<256xi32> to vector<1x256xi32>
    %c0_28 = arith.constant 0 : index
    %c0_29 = arith.constant 0 : index
    %c0_30 = arith.constant 0 : index
    %93 = vector.load %arg6[%c0_28, %c0_29, %c0_30] : memref<1x1x256xi32, #tpu.memory_space<vmem>>, vector<1x1x256xi32>
    %94 = vector.shape_cast %93 : vector<1x1x256xi32> to vector<1x256xi32>
    %95 = vector.shape_cast %92 : vector<1x256xi32> to vector<1x1x256xi32>
    tpu.vector_store %arg6[%c0_28, %c0_29, %c0_30], %95 {strides = array<i32>} : memref<1x1x256xi32, #tpu.memory_space<vmem>>, vector<1x1x256xi32>,
    %96 = tpu.iota {dimensions = array<i32: 0>} : vector<8x128xi32>
    %c0_i32 = arith.constant 0 : i32
    %97 = vector.broadcast %c0_i32 : i32 to vector<8x128xi32>
    %98 = arith.cmpi eq, %96, %97 : vector<8x128xi32>
    %c1_i32 = arith.constant 1 : i32
    %99 = vector.broadcast %c1_i32 : i32 to vector<8x128xi32>
    %100 = arith.cmpi eq, %96, %99 : vector<8x128xi32>
    %c2_i32 = arith.constant 2 : i32
    %101 = vector.broadcast %c2_i32 : i32 to vector<8x128xi32>
    %102 = arith.cmpi eq, %96, %101 : vector<8x128xi32>
    %c3_i32 = arith.constant 3 : i32
    %103 = vector.broadcast %c3_i32 : i32 to vector<8x128xi32>
    %104 = arith.cmpi eq, %96, %103 : vector<8x128xi32>
    %cst_31 = arith.constant 0.000000e+00 : f32
    %105 = vector.broadcast %84 : f32 to vector<8x128xf32>
    %106 = vector.broadcast %cst_31 : f32 to vector<8x128xf32>
    %107 = arith.select %104, %105, %106 : vector<8x128xi1>, vector<8x128xf32>
    %108 = vector.broadcast %78 : f32 to vector<8x128xf32>
    %109 = arith.select %102, %108, %107 : vector<8x128xi1>, vector<8x128xf32>
    %110 = vector.broadcast %58 : f32 to vector<8x128xf32>
    %111 = arith.select %100, %110, %109 : vector<8x128xi1>, vector<8x128xf32>
    %112 = vector.broadcast %44 : f32 to vector<8x128xf32>
    %113 = arith.select %98, %112, %111 : vector<8x128xi1>, vector<8x128xf32>
    %c0_i32_32 = arith.constant 0 : i32
    %114 = arith.cmpi eq, %arg1, %c0_i32_32 : i32
    %115 = arith.extui %114 : i1 to i32
    %c0_i32_33 = arith.constant 0 : i32
    %116 = arith.cmpi ne, %115, %c0_i32_33 : i32
    scf.if %116 {
      %c0_36 = arith.constant 0 : index
      %c0_37 = arith.constant 0 : index
      %c0_38 = arith.constant 0 : index
      %120 = vector.load %arg7[%c0_36, %c0_37, %c0_38] : memref<1x8x128xf32, #tpu.memory_space<vmem>>, vector<1x8x128xf32>
      %121 = vector.shape_cast %120 : vector<1x8x128xf32> to vector<8x128xf32>
      %122 = vector.shape_cast %113 : vector<8x128xf32> to vector<1x8x128xf32>
      tpu.vector_store %arg7[%c0_36, %c0_37, %c0_38], %122 {strides = array<i32>} : memref<1x8x128xf32, #tpu.memory_space<vmem>>, vector<1x8x128xf32>,
    } else {
    }
    %c0_i32_34 = arith.constant 0 : i32
    %117 = arith.cmpi ne, %arg1, %c0_i32_34 : i32
    %118 = arith.extui %117 : i1 to i32
    %c0_i32_35 = arith.constant 0 : i32
    %119 = arith.cmpi ne, %118, %c0_i32_35 : i32
    scf.if %119 {
      %c0_36 = arith.constant 0 : index
      %c0_37 = arith.constant 0 : index
      %c0_38 = arith.constant 0 : index
      %120 = vector.load %arg7[%c0_36, %c0_37, %c0_38] : memref<1x8x128xf32, #tpu.memory_space<vmem>>, vector<1x8x128xf32>
      %121 = vector.shape_cast %120 : vector<1x8x128xf32> to vector<8x128xf32>
      %122 = arith.addf %121, %113 : vector<8x128xf32>
      %c0_39 = arith.constant 0 : index
      %c0_40 = arith.constant 0 : index
      %c0_41 = arith.constant 0 : index
      %123 = vector.load %arg7[%c0_39, %c0_40, %c0_41] : memref<1x8x128xf32, #tpu.memory_space<vmem>>, vector<1x8x128xf32>
      %124 = vector.shape_cast %123 : vector<1x8x128xf32> to vector<8x128xf32>
      %125 = vector.shape_cast %122 : vector<8x128xf32> to vector<1x8x128xf32>
      tpu.vector_store %arg7[%c0_39, %c0_40, %c0_41], %125 {strides = array<i32>} : memref<1x8x128xf32, #tpu.memory_space<vmem>>, vector<1x8x128xf32>,
    } else {
    }
    return
  }
  func.func @transform_0(%arg0: i32, %arg1: i32) -> (i32, i32, i32) {
    %c0_i32 = arith.constant 0 : i32
    %c0_i32_0 = arith.constant 0 : i32
    return %arg0, %c0_i32, %arg1 : i32, i32, i32
  }
  func.func @transform_1(%arg0: i32, %arg1: i32) -> (i32, i32, i32) {
    %c0_i32 = arith.constant 0 : i32
    %c0_i32_0 = arith.constant 0 : i32
    return %arg0, %c0_i32, %arg1 : i32, i32, i32
  }
  func.func @transform_2(%arg0: i32, %arg1: i32) -> (i32, i32) {
    %c0_i32 = arith.constant 0 : i32
    %c0_i32_0 = arith.constant 0 : i32
    %c0_i32_1 = arith.constant 0 : i32
    return %c0_i32, %c0_i32_0 : i32, i32
  }
  func.func @transform_3(%arg0: i32, %arg1: i32) -> (i32, i32) {
    %c0_i32 = arith.constant 0 : i32
    %c0_i32_0 = arith.constant 0 : i32
    %c0_i32_1 = arith.constant 0 : i32
    return %c0_i32, %c0_i32_0 : i32, i32
  }
  func.func @transform_4(%arg0: i32, %arg1: i32) -> (i32, i32, i32) {
    %c0_i32 = arith.constant 0 : i32
    %c0_i32_0 = arith.constant 0 : i32
    return %arg0, %c0_i32, %arg1 : i32, i32, i32
  }
  func.func @transform_5(%arg0: i32, %arg1: i32) -> (i32, i32, i32) {
    %c0_i32 = arith.constant 0 : i32
    %c0_i32_0 = arith.constant 0 : i32
    %c0_i32_1 = arith.constant 0 : i32
    return %arg0, %c0_i32, %c0_i32_0 : i32, i32, i32
  }
}

</mosaic_0001>

<llo_original>
// kernel: tpu_custom_call.1
$region0: #{tpu_custom_call.1}
  #allocation0 [shape = 'u32[]', space=smem, size = 0x4, offset = 0x4, fixed_abs, tag = 'smem constant byte address 0x4 - core index']
  #allocation1 [shape = 'u32[144,128]{1,0:T(1,128)}', space=vmem, size = 0x12000, scoped, tag = 'internal scratch']
  %s0 = inlined_call_operand.vmem [shape: bf16[2,4,256], index: 0, kind: input, shape index: {}]
  %s1 = inlined_call_operand.vmem [shape: s32[2,1,256], index: 1, kind: input, shape index: {}]
  %s2 = inlined_call_operand.vmem [shape: bf16[24,4], index: 2, kind: input, shape index: {}]
  %s3 = inlined_call_operand.vmem [shape: f32[24,1], index: 3, kind: input, shape index: {}]
  %s4 = inlined_call_operand.hbm [shape: s32[2,1,256], index: 4, kind: output, shape index: {0}]
  %s5 = inlined_call_operand.hbm [shape: f32[2,8,128], index: 5, kind: output, shape index: {1}]
  %6 = xla_tuple %s4, %s5
  %s7 = sld [smem:[#allocation0]]
  $region65: #{tpu_custom_call.1} parent=0
    _
  %s9 = ssub.s32 1, %s7
  %s10 = scalar_select 0, %s9, %s7
  $region1: #{tpu_custom_call.1} parent=0
    #allocation2 [shape = 'u8[2048]{0}', space=vmem, size = 0x800, scoped, tag = 'output window, operand 0']
    #allocation3 [shape = 's32[2]{0}', space=sflag, size = 0x8, scoped, tag = 'scoped memory for tpu_custom_call.1']
    #allocation4 [shape = 'u8[8192]{0}', space=vmem, size = 0x2000, scoped, tag = 'output window, operand 1']
    #allocation5 [shape = 's32[2]{0}', space=sflag, size = 0x8, scoped, tag = 'scoped memory for tpu_custom_call.1']
    %11 = vsyncpa [#allocation3], 0
    %s12 = scalar_lea.sflag [#allocation3], 1
    %13 = vsyncpa %s12, 0
    %14 = vsyncpa [#allocation5], 0
    %s15 = scalar_lea.sflag [#allocation5], 1
    %16 = vsyncpa %s15, 0
    loop: start=0, step=1, limit=4
    $region2: #{tpu_custom_call.1} parent=1 // loop_pre_header
      _
    $region3: #{tpu_custom_call.1} parent=1 // loop_header
      %s18 = sphi 0, %s22
      %p19 = scmp.ge.s32.totalorder %s18, 4
      %s25 = sphi 0, %s37
      %s26 = sphi 0, %s33
      %s27 = sphi 0, %s25
      %s28 = sphi 0, %s26
      %s29 = sphi 0, %s27
      %s30 = sphi 0, %s28
      %s42 = sphi 0, %s44
      %s45 = sphi 0, %s42
      %s46 = sphi 0, %s45
      %s62 = sphi 0, %s46
      %s70 = sphi 0, %s72
      %s73 = sphi 0, %s70
      %s74 = sphi 0, %s73
      %s90 = sphi 0, %s74
      %s94 = sphi 0, %s94
      %s96 = sphi 0, %s94
      %s97 = sphi 0, %s96
      %s111 = sphi 0, %s97
      %s115 = sphi 0, %s115
      %s117 = sphi 0, %s115
      %s118 = sphi 0, %s117
      %s132 = sphi 0, %s118
      %s140 = sphi 0, %s142
      %s143 = sphi 0, %s140
      %s144 = sphi 0, %s143
      %s160 = sphi 0, %s144
      %s166 = sphi 0, %s168
      %s169 = sphi 0, %s166
      %s170 = sphi 0, %s169
      %s186 = sphi 0, %s170
    $region4: #{tpu_custom_call.1} parent=1 // loop_header_branch
      %21 = sbr.rel (%p19) target = $region8
    $region5: #{tpu_custom_call.1} parent=1 // loop_body
      %s23 = ssub.s32 %s18, 1
      %s24 = ssub.s32 %s18, 2
      %s31 = sadd.s32 1, %s26
      %p32 = scmp.ge.s32.totalorder %s31, 1
      %s33 = scalar_select %p32, 0, %s31
      %s34 = sadd.s32 1, %s25
      %s35 = scalar_select %p32, %s34, %s25
      %p36 = scmp.ge.s32.totalorder %s35, 2
      %s37 = scalar_select %p36, 0, %s35
      %s38 = ssub.s32 %s25, %s37
      %s39 = ssub.s32 %s26, %s33
      %s40 = sor.u32 %s38, %s39
      %p41 = scmp.eq.s32.totalorder %s40, 0
      %s43 = sadd.s32 %s42, 1
      %s44 = scalar_select %p41, %s42, %s43
      %p47 = pneg %p41
      %p48 = scmp.eq.s32.totalorder %s18, 1
      %p49 = por %p47, %p48
      %p50 = scmp.ne.s32.totalorder %s42, %s45
      %p51 = scmp.eq.s32.totalorder %s18, 0
      %p52 = por %p50, %p51
      %p53 = scmp.ne.s32.totalorder %s42, %s45
      %p54 = scmp.eq.s32.totalorder %s23, 1
      %p55 = por %p53, %p54
      %p56 = scmp.ne.s32.totalorder %s45, %s46
      %p57 = scmp.eq.s32.totalorder %s23, 0
      %p58 = por %p56, %p57
      %p59 = scmp.ne.s32.totalorder %s45, %s46
      %p60 = scmp.eq.s32.totalorder %s24, 1
      %p61 = por %p59, %p60
      %p63 = scmp.ne.s32.totalorder %s46, %s62
      %p64 = scmp.eq.s32.totalorder %s24, 0
      %p65 = por %p63, %p64
      %s66 = ssub.s32 %s25, %s37
      %s67 = ssub.s32 %s26, %s33
      %s68 = sor.u32 %s66, %s67
      %p69 = scmp.eq.s32.totalorder %s68, 0
      %s71 = sadd.s32 %s70, 1
      %s72 = scalar_select %p69, %s70, %s71
      %p75 = pneg %p69
      %p76 = scmp.eq.s32.totalorder %s18, 1
      %p77 = por %p75, %p76
      %p78 = scmp.ne.s32.totalorder %s70, %s73
      %p79 = scmp.eq.s32.totalorder %s18, 0
      %p80 = por %p78, %p79
      %p81 = scmp.ne.s32.totalorder %s70, %s73
      %p82 = scmp.eq.s32.totalorder %s23, 1
      %p83 = por %p81, %p82
      %p84 = scmp.ne.s32.totalorder %s73, %s74
      %p85 = scmp.eq.s32.totalorder %s23, 0
      %p86 = por %p84, %p85
      %p87 = scmp.ne.s32.totalorder %s73, %s74
      %p88 = scmp.eq.s32.totalorder %s24, 1
      %p89 = por %p87, %p88
      %p91 = scmp.ne.s32.totalorder %s74, %s90
      %p92 = scmp.eq.s32.totalorder %s24, 0
      %p93 = por %p91, %p92
      %s95 = sadd.s32 %s94, 1
      %p98 = scmp.eq.s32.totalorder %s18, 1
      %p99 = scmp.ne.s32.totalorder %s94, %s96
      %p100 = scmp.eq.s32.totalorder %s18, 0
      %p101 = por %p99, %p100
      %p102 = scmp.ne.s32.totalorder %s94, %s96
      %p103 = scmp.eq.s32.totalorder %s23, 1
      %p104 = por %p102, %p103
      %p105 = scmp.ne.s32.totalorder %s96, %s97
      %p106 = scmp.eq.s32.totalorder %s23, 0
      %p107 = por %p105, %p106
      %p108 = scmp.ne.s32.totalorder %s96, %s97
      %p109 = scmp.eq.s32.totalorder %s24, 1
      %p110 = por %p108, %p109
      %p112 = scmp.ne.s32.totalorder %s97, %s111
      %p113 = scmp.eq.s32.totalorder %s24, 0
      %p114 = por %p112, %p113
      %s116 = sadd.s32 %s115, 1
      %p119 = scmp.eq.s32.totalorder %s18, 1
      %p120 = scmp.ne.s32.totalorder %s115, %s117
      %p121 = scmp.eq.s32.totalorder %s18, 0
      %p122 = por %p120, %p121
      %p123 = scmp.ne.s32.totalorder %s115, %s117
      %p124 = scmp.eq.s32.totalorder %s23, 1
      %p125 = por %p123, %p124
      %p126 = scmp.ne.s32.totalorder %s117, %s118
      %p127 = scmp.eq.s32.totalorder %s23, 0
      %p128 = por %p126, %p127
      %p129 = scmp.ne.s32.totalorder %s117, %s118
      %p130 = scmp.eq.s32.totalorder %s24, 1
      %p131 = por %p129, %p130
      %p133 = scmp.ne.s32.totalorder %s118, %s132
      %p134 = scmp.eq.s32.totalorder %s24, 0
      %p135 = por %p133, %p134
      %s136 = ssub.s32 %s25, %s37
      %s137 = ssub.s32 %s26, %s33
      %s138 = sor.u32 %s136, %s137
      %p139 = scmp.eq.s32.totalorder %s138, 0
      %s141 = sadd.s32 %s140, 1
      %s142 = scalar_select %p139, %s140, %s141
      %p145 = pneg %p139
      %p146 = scmp.eq.s32.totalorder %s18, 1
      %p147 = por %p145, %p146
      %p148 = scmp.ne.s32.totalorder %s140, %s143
      %p149 = scmp.eq.s32.totalorder %s18, 0
      %p150 = por %p148, %p149
      %p151 = scmp.ne.s32.totalorder %s140, %s143
      %p152 = scmp.eq.s32.totalorder %s23, 1
      %p153 = por %p151, %p152
      %p154 = scmp.ne.s32.totalorder %s143, %s144
      %p155 = scmp.eq.s32.totalorder %s23, 0
      %p156 = por %p154, %p155
      %p157 = scmp.ne.s32.totalorder %s143, %s144
      %p158 = scmp.eq.s32.totalorder %s24, 1
      %p159 = por %p157, %p158
      %p161 = scmp.ne.s32.totalorder %s144, %s160
      %p162 = scmp.eq.s32.totalorder %s24, 0
      %p163 = por %p161, %p162
      %s164 = ssub.s32 %s25, %s37
      %p165 = scmp.eq.s32.totalorder %s164, 0
      %s167 = sadd.s32 %s166, 1
      %s168 = scalar_select %p165, %s166, %s167
      %p171 = pneg %p165
      %p172 = scmp.eq.s32.totalorder %s18, 1
      %p173 = por %p171, %p172
      %p174 = scmp.ne.s32.totalorder %s166, %s169
      %p175 = scmp.eq.s32.totalorder %s18, 0
      %p176 = por %p174, %p175
      %p177 = scmp.ne.s32.totalorder %s166, %s169
      %p178 = scmp.eq.s32.totalorder %s23, 1
      %p179 = por %p177, %p178
      %p180 = scmp.ne.s32.totalorder %s169, %s170
      %p181 = scmp.eq.s32.totalorder %s23, 0
      %p182 = por %p180, %p181
      %p183 = scmp.ne.s32.totalorder %s169, %s170
      %p184 = scmp.eq.s32.totalorder %s24, 1
      %p185 = por %p183, %p184
      %p187 = scmp.ne.s32.totalorder %s170, %s186
      %p188 = scmp.eq.s32.totalorder %s24, 0
      %p189 = por %p187, %p188
      %p190 = scmp.le.s32.totalorder 1, %s18
      %p191 = scmp.lt.s32.totalorder %s18, 3
      %p192 = pnand %p190, %p191
      %p193 = pneg %p192
      // Predicated region
      $region9: #{tpu_custom_call.1} parent=5 // pred_check
        _
      $region10: #{tpu_custom_call.1} parent=5 // pred_check_branch
        %195 = sbr.rel (%p192) target = $region12
      $region11: #{tpu_custom_call.1} parent=5 // pred_region
        %s196 = ssub.s32 %s18, 1
        // Predicated region
        $region13: #{tpu_custom_call.1} parent=11 // pred_check
          %p197 = pneg %p107
        $region14: #{tpu_custom_call.1} parent=11 // pred_check_branch
          %199 = sbr.rel (%p197) target = $region16
        $region15: #{tpu_custom_call.1} parent=11 // pred_region
          _
        $region16: #{tpu_custom_call.1} parent=11 // pred_fallthru
          _
        // Predicated region
        $region17: #{tpu_custom_call.1} parent=11 // pred_check
          %p200 = pneg %p128
        $region18: #{tpu_custom_call.1} parent=11 // pred_check_branch
          %202 = sbr.rel (%p200) target = $region20
        $region19: #{tpu_custom_call.1} parent=11 // pred_region
          _
        $region20: #{tpu_custom_call.1} parent=11 // pred_fallthru
          _
      $region12: #{tpu_custom_call.1} parent=5 // pred_fallthru
        _
      %p203 = scmp.lt.s32.totalorder %s18, 2
      // Predicated region
      $region21: #{tpu_custom_call.1} parent=5 // pred_check
        %p204 = pneg %p203
      $region22: #{tpu_custom_call.1} parent=5 // pred_check_branch
        %206 = sbr.rel (%p204) target = $region24
      $region23: #{tpu_custom_call.1} parent=5 // pred_region
        // Predicated region
        $region25: #{tpu_custom_call.1} parent=23 // pred_check
          %p207 = pneg %p52
        $region26: #{tpu_custom_call.1} parent=23 // pred_check_branch
          %209 = sbr.rel (%p207) target = $region28
        $region27: #{tpu_custom_call.1} parent=23 // pred_region
          %s210 = smul.u32 2, %s26
          %p211 = scmp.lt.s32.totalorder %s25, 1
          %s212 = scalar_select %p211, %s25, 1
          %p213 = scmp.lt.s32.totalorder %s210, 1
          %s214 = scalar_select %p213, %s210, 1
          %s215 = smul.addr %s212, 2
          %s216 = sadd.s32 %s214, %s215
          %s217 = smul.addr %s216, 2
          %s218 = scalar_lea.vmem %s0, %s217
          %s219 = smul.u32 2, %s26
        $region28: #{tpu_custom_call.1} parent=23 // pred_fallthru
          _
        // Predicated region
        $region29: #{tpu_custom_call.1} parent=23 // pred_check
          %p220 = pneg %p80
        $region30: #{tpu_custom_call.1} parent=23 // pred_check_branch
          %222 = sbr.rel (%p220) target = $region32
        $region31: #{tpu_custom_call.1} parent=23 // pred_region
          %s223 = smul.u32 2, %s26
          %p224 = scmp.lt.s32.totalorder %s25, 1
          %s225 = scalar_select %p224, %s25, 1
          %p226 = scmp.lt.s32.totalorder %s223, 1
          %s227 = scalar_select %p226, %s223, 1
          %s228 = smul.addr %s225, 2
          %s229 = sadd.s32 %s227, %s228
          %s230 = scalar_lea.vmem %s1, %s229
          %s231 = smul.u32 2, %s26
        $region32: #{tpu_custom_call.1} parent=23 // pred_fallthru
          _
      $region24: #{tpu_custom_call.1} parent=5 // pred_fallthru
        _
      %p232 = scmp.le.s32.totalorder 1, %s18
      %p233 = scmp.lt.s32.totalorder %s18, 3
      %p234 = pnand %p232, %p233
      %p235 = pneg %p234
      // Predicated region
      $region33: #{tpu_custom_call.1} parent=5 // pred_check
        _
      $region34: #{tpu_custom_call.1} parent=5 // pred_check_branch
        %237 = sbr.rel (%p234) target = $region36
      $region35: #{tpu_custom_call.1} parent=5 // pred_region
        %s238 = ssub.s32 %s18, 1
        %s239 = smul.u32 2, %s28
        %p240 = scmp.lt.s32.totalorder %s27, 1
        %s241 = scalar_select %p240, %s27, 1
        %p242 = scmp.lt.s32.totalorder %s239, 1
        %s243 = scalar_select %p242, %s239, 1
        %s244 = smul.addr %s241, 2
        %s245 = sadd.s32 %s243, %s244
        %s246 = smul.addr %s245, 2
        %s247 = scalar_lea.vmem %s0, %s246
        %p248 = pneg %p58
        %p249 = pneg %p55
        %s250 = smul.u32 2, %s28
        %p251 = scmp.lt.s32.totalorder %s27, 1
        %s252 = scalar_select %p251, %s27, 1
        %p253 = scmp.lt.s32.totalorder %s250, 1
        %s254 = scalar_select %p253, %s250, 1
        %s255 = smul.addr %s252, 2
        %s256 = sadd.s32 %s254, %s255
        %s257 = scalar_lea.vmem %s1, %s256
        %p258 = pneg %p86
        %p259 = pneg %p83
        %p260 = pneg %p107
        %p261 = pneg %p104
        %p262 = pneg %p128
        %p263 = pneg %p125
        %p264 = pneg %p156
        %p265 = pneg %p153
        %s266 = sand.u32 %s143, 1
        %s267 = scalar_lea.sflag [#allocation3], %s266
        %s268 = sand.u32 %s143, 1
        %s269 = smul.addr %s268, 2
        %s270 = scalar_lea.vmem [#allocation2], %s269
        %p271 = pneg %p182
        %p272 = pneg %p179
        %s273 = sand.u32 %s169, 1
        %s274 = scalar_lea.sflag [#allocation5], %s273
        %s275 = sand.u32 %s169, 1
        %s276 = smul.addr %s275, 8
        %s277 = scalar_lea.vmem [#allocation4], %s276
        %s278 = smul.u32 2, %s28
        %p279 = scmp.lt.s32.totalorder %s27, 1
        %s280 = scalar_select %p279, %s27, 1
        %p281 = scmp.lt.s32.totalorder %s278, 1
        %s282 = scalar_select %p281, %s278, 1
        %s283 = smul.addr %s280, 2
        %s284 = sadd.s32 %s282, %s283
        %s285 = smul.addr %s284, 2
        %s286 = scalar_lea.vmem %s0, %s285
        %s287 = smul.u32 2, %s28
        %s288 = smul.u32 2, %s28
        %p289 = scmp.lt.s32.totalorder %s27, 1
        %s290 = scalar_select %p289, %s27, 1
        %p291 = scmp.lt.s32.totalorder %s288, 1
        %s292 = scalar_select %p291, %s288, 1
        %s293 = smul.addr %s290, 2
        %s294 = sadd.s32 %s292, %s293
        %s295 = scalar_lea.vmem %s1, %s294
        %s296 = smul.u32 2, %s28
        %s297 = smul.u32 2, %s28
        %v299 = vld [vmem:[%s286] sm:$0xf]
        %v300 = vld [vmem:[%s2] sm:$0xf]
        %v301 = vld [vmem:[%s2 + $0x4] sm:$0xf]
        %v302 = vld [vmem:[%s2 + $0x8] sm:$0xf]
        %v303 = vld [vmem:[%s3] sm:$0xff]
        %v304 = vld [vmem:[%s3 + $0x8] sm:$0xff]
        %v305 = vld [vmem:[%s3 + $0x10] sm:$0xff]
        %307 = vset.pattern.permute.xlu0 0
        %308 = vperm.xlu0 %307, %v303
        %v309 = vpop.permute.xlu0 %308
        %312 = vset.pattern.permute.xlu0 0
        %313 = vperm.xlu0 %312, %v304
        %v314 = vpop.permute.xlu0 %313
        %317 = vset.pattern.permute.xlu0 0
        %318 = vperm.xlu0 %317, %v305
        %v319 = vpop.permute.xlu0 %318
        %v324 = vunpack.c.l.b16 %v300
        %v325 = vunpack.c.l.b16 %v301
        %v326 = vunpack.c.l.b16 %v302
        %v327 = vpack.c.b16 %v325, %v324
        %v328 = vpack.c.b16 %v326, %v326
        %v331 = vunpack.c.l.s4 1983009808
        %v332 = vunpack.c.0.s8 %v331
        %v333 = vlaneseq
        %v334 = vshrl.u32 %v333, 7
        %v335 = vsub.s32 %v332, %v334
        %v336 = vrot.slane %v299, %v335
        %v337 = vcombine.high %v336, %v336
        %vm338 = vcmask 31744
        %v340 = vsel %vm338, %v327, 0
        %v343 = vsel %vm338, %v328, 0
        %vm345 = vcmask 1041408
        %v347 = vsel %vm345, %v336, 0
        %v350 = vsel %vm345, %v337, 0
        %352 = vmatprep.subr.bf16.mxu0 %v350
        %353 = vmatpush1.bf16.msra.mxu0 %v347
        %354 = vmatprep.subr.bf16.mxu0 0
        %355 = vmatpush1.bf16.msra.mxu0 0
        %356 = vmatprep.subr.bf16.mxu0 0
        %357 = vmatpush1.bf16.msra.mxu0 0
        %358 = vmatprep.subr.bf16.mxu0 0
        %359 = vmatpush1.bf16.msra.mxu0 0
        %360 = vmatprep.subr.bf16.mxu0 0
        %361 = vmatpush1.bf16.msra.mxu0 0
        %362 = vmatprep.subr.bf16.mxu0 0
        %363 = vmatpush1.bf16.msra.mxu0 0
        %364 = vmatprep.subr.bf16.mxu0 0
        %365 = vmatpush1.bf16.msra.mxu0 0
        %366 = vmatprep.subr.bf16.mxu0 0
        %367 = vmatpush1.bf16.msra.mxu0 0
        %368 = vmatprep.subr.bf16.mxu0 0
        %369 = vmatpush1.bf16.msra.mxu0 0
        %370 = vmatprep.subr.bf16.mxu0 0
        %371 = vmatpush1.bf16.msra.mxu0 0
        %372 = vmatprep.subr.bf16.mxu0 0
        %373 = vmatpush1.bf16.msra.mxu0 0
        %374 = vmatprep.subr.bf16.mxu0 0
        %375 = vmatpush1.bf16.msra.mxu0 0
        %376 = vmatprep.subr.bf16.mxu0 0
        %377 = vmatpush1.bf16.msra.mxu0 0
        %378 = vmatprep.subr.bf16.mxu0 0
        %379 = vmatpush1.bf16.msra.mxu0 0
        %380 = vmatprep.subr.bf16.mxu0 0
        %381 = vmatpush1.bf16.msra.mxu0 0
        %382 = vmatprep.subr.bf16.mxu0 0
        %383 = vmatpush1.bf16.msra.mxu0 0
        %384 = vmatprep.mubr.bf16.mxu0 0
        %385 = vmatmul.mubr.bf16.gmra.mrb[0].mxu0 %v340
        %v386 = vpop.f32.mrb[0].mxu0
        %v387 = vadd.f32 %v309, %v386
        %v388 = vpop.f32.mrb[0].mxu0
        %v389 = vadd.f32 %v309, %v388
        %v390 = vpop.f32.mrb[0].mxu0
        %v391 = vadd.f32 %v314, %v390
        %v392 = vpop.f32.mrb[0].mxu0
        %v393 = vadd.f32 %v314, %v392
        %394 = vmatprep.mubr.bf16.mxu0 0
        %395 = vmatmul.mubr.bf16.gmra.mrb[0].mxu0 %v343
        %v396 = vpop.f32.mrb[0].mxu0
        %v397 = vadd.f32 %v319, %v396
        %v398 = vpop.f32.mrb[0].mxu0
        %v399 = vadd.f32 %v319, %v398
        %v400 = vpop.f32.mrb[0].mxu0
        %v401 = vpop.f32.mrb[0].mxu0
        %402 = vdwg.mxu0
        %v403 = vrot.slane %v387, 4
        %v404 = vmax.f32 %v387, %v403
        %v405 = vrot.slane %v404, 2
        %v406 = vmax.f32 %v404, %v405
        %v407 = vrot.slane %v406, 1
        %v408 = vmax.f32 %v406, %v407
        %v409 = vrot.slane %v389, 4
        %v410 = vmax.f32 %v389, %v409
        %v411 = vrot.slane %v410, 2
        %v412 = vmax.f32 %v410, %v411
        %v413 = vrot.slane %v412, 1
        %v414 = vmax.f32 %v412, %v413
        %v415 = vsub.f32 %v387, %v408
        %v416 = vsub.f32 %v389, %v414
        %v417 = vmul.f32 %v415, 1.442695
        %v418 = vpow.pop %v417
        %v419 = vmul.f32 %v416, 1.442695
        %v420 = vpow.pop %v419
        %v421 = vrot.slane %v418, 4
        %v422 = vadd.f32 %v418, %v421
        %v423 = vrot.slane %v422, 2
        %v424 = vadd.f32 %v422, %v423
        %v425 = vrot.slane %v424, 1
        %v426 = vadd.f32 %v424, %v425
        %v427 = vrot.slane %v420, 4
        %v428 = vadd.f32 %v420, %v427
        %v429 = vrot.slane %v428, 2
        %v430 = vadd.f32 %v428, %v429
        %v431 = vrot.slane %v430, 1
        %v432 = vadd.f32 %v430, %v431
        %v433 = vlog2.pop %v426
        %v434 = vmul.f32 %v433, 0.6931472
        %v435 = vlog2.pop %v432
        %v436 = vmul.f32 %v435, 0.6931472
        %v437 = vadd.f32 %v408, %v434
        %v438 = vadd.f32 %v414, %v436
        %v439 = vrot.slane %v397, 4
        %v440 = vmax.f32 %v397, %v439
        %v441 = vrot.slane %v440, 2
        %v442 = vmax.f32 %v440, %v441
        %v443 = vrot.slane %v442, 1
        %v444 = vmax.f32 %v442, %v443
        %v445 = vrot.slane %v399, 4
        %v446 = vmax.f32 %v399, %v445
        %v447 = vrot.slane %v446, 2
        %v448 = vmax.f32 %v446, %v447
        %v449 = vrot.slane %v448, 1
        %v450 = vmax.f32 %v448, %v449
        %v451 = vsub.f32 %v397, %v444
        %v452 = vsub.f32 %v399, %v450
        %v453 = vmul.f32 %v451, 1.442695
        %v454 = vpow.pop %v453
        %v455 = vmul.f32 %v452, 1.442695
        %v456 = vpow.pop %v455
        %v457 = vrot.slane %v454, 4
        %v458 = vadd.f32 %v454, %v457
        %v459 = vrot.slane %v458, 2
        %v460 = vadd.f32 %v458, %v459
        %v461 = vrot.slane %v460, 1
        %v462 = vadd.f32 %v460, %v461
        %v463 = vrot.slane %v456, 4
        %v464 = vadd.f32 %v456, %v463
        %v465 = vrot.slane %v464, 2
        %v466 = vadd.f32 %v464, %v465
        %v467 = vrot.slane %v466, 1
        %v468 = vadd.f32 %v466, %v467
        %v469 = vlog2.pop %v462
        %v470 = vmul.f32 %v469, 0.6931472
        %v471 = vlog2.pop %v468
        %v472 = vmul.f32 %v471, 0.6931472
        %v473 = vadd.f32 %v444, %v470
        %v474 = vadd.f32 %v450, %v472
        %v475 = vsub.f32 %v387, %v437
        %v476 = vsub.f32 %v389, %v438
        %v477 = vsub.f32 %v397, %v473
        %v478 = vsub.f32 %v399, %v474
        %v479 = vmul.f32 %v477, 1.442695
        %v480 = vpow.pop %v479
        %v481 = vmul.f32 %v478, 1.442695
        %v482 = vpow.pop %v481
        %v483 = vsub.f32 %v477, %v475
        %v484 = vsub.f32 %v478, %v476
        %v485 = vmul.f32 %v480, %v483
        %v486 = vmul.f32 %v482, %v484
        %v487 = vrot.slane %v485, 4
        %v488 = vadd.f32 %v485, %v487
        %v489 = vrot.slane %v488, 2
        %v490 = vadd.f32 %v488, %v489
        %v491 = vrot.slane %v490, 1
        %v492 = vadd.f32 %v490, %v491
        %v493 = vrot.slane %v486, 4
        %v494 = vadd.f32 %v486, %v493
        %v495 = vrot.slane %v494, 2
        %v496 = vadd.f32 %v494, %v495
        %v497 = vrot.slane %v496, 1
        %v498 = vadd.f32 %v496, %v497
        %v499 = vld [vmem:[%s295] sm:$0x3]
        %vm500 = vcmp.ne.s32.totalorder %v499, 255
        %vm501 = vcmask 1040384
        %v502 = vsel %vm501, %v492, 0.0
        %v503 = vsel %vm501, %v498, 0.0
        %v504 = vadd.f32 %v502, %v503
        %505 = vadd.xlane.f32.xlu0 %v504
        %v506 = vpop.xlane.xlu0 %505
        %v507 = vrot.slane %v506, 4
        %v508 = vadd.f32 %v506, %v507
        %v509 = vrot.slane %v508, 2
        %v510 = vadd.f32 %v508, %v509
        %v511 = vrot.slane %v510, 1
        %v512 = vadd.f32 %v510, %v511
        %s513 = vtos %v512
        %v514 = vlaneseq
        %v515 = vshrl.u32 %v514, 7
        %v516 = vlaneseq
        %v517 = vshrl.u32 %v516, 7
        %v518 = vsub.s32 0, %v517
        %v519 = vrot.slane %v499, %v518
        %v520 = vlaneseq
        %v521 = vshrl.u32 %v520, 7
        %v522 = vsub.s32 1, %v521
        %v523 = vrot.slane %v499, %v522
        %vm524 = vcmp.eq.s32.totalorder %v515, %v519
        %vm525 = vcmp.eq.s32.totalorder %v515, %v523
        %v526 = vsel %vm524, %v387, 0.0
        %v527 = vsel %vm525, %v389, 0.0
        %v528 = vrot.slane %v526, 4
        %v529 = vadd.f32 %v526, %v528
        %v530 = vrot.slane %v529, 2
        %v531 = vadd.f32 %v529, %v530
        %v532 = vrot.slane %v531, 1
        %v533 = vadd.f32 %v531, %v532
        %v534 = vrot.slane %v527, 4
        %v535 = vadd.f32 %v527, %v534
        %v536 = vrot.slane %v535, 2
        %v537 = vadd.f32 %v535, %v536
        %v538 = vrot.slane %v537, 1
        %v539 = vadd.f32 %v537, %v538
        %v540 = vsub.f32 %v437, %v533
        %v541 = vsub.f32 %v438, %v539
        %v544 = vcombine.low %v540, %v541
        %v546 = vunpack.c.l.s4 1966171168
        %v547 = vunpack.c.0.s8 %v546
        %v548 = vlaneseq
        %v549 = vshrl.u32 %v548, 7
        %v550 = vsub.s32 %v547, %v549
        %v551 = vrot.slane %v544, %v550
        %v553 = vunpack.c.l.s4 1966171168
        %v554 = vunpack.c.0.s8 %v553
        %v555 = vlaneseq
        %v556 = vshrl.u32 %v555, 7
        %v557 = vsub.s32 %v554, %v556
        %v558 = vrot.slane %v551, %v557
        %v560 = vsel %vm500, %v558, 0.0
        %v562 = vlaneseq
        %v563 = vshrl.u32 %v562, 7
        %v564 = vsub.s32 0, %v563
        %v565 = vrot.slane %v560, %v564
        %v566 = vlaneseq
        %v567 = vshrl.u32 %v566, 7
        %v568 = vsub.s32 1, %v567
        %v569 = vrot.slane %v560, %v568
        %v572 = vsel %vm501, %v565, 0.0
        %v573 = vsel %vm501, %v569, 0.0
        %v574 = vadd.f32 %v572, %v573
        %575 = vadd.xlane.f32.xlu0 %v574
        %v576 = vpop.xlane.xlu0 %575
        %v577 = vrot.slane %v576, 4
        %v578 = vadd.f32 %v576, %v577
        %v579 = vrot.slane %v578, 2
        %v580 = vadd.f32 %v578, %v579
        %v581 = vrot.slane %v580, 1
        %v582 = vadd.f32 %v580, %v581
        %s583 = vtos %v582
        %v584 = vrot.slane %v391, 4
        %v585 = vmax.f32 %v391, %v584
        %v586 = vrot.slane %v585, 2
        %v587 = vmax.f32 %v585, %v586
        %v588 = vrot.slane %v587, 1
        %v589 = vmax.f32 %v587, %v588
        %v590 = vrot.slane %v393, 4
        %v591 = vmax.f32 %v393, %v590
        %v592 = vrot.slane %v591, 2
        %v593 = vmax.f32 %v591, %v592
        %v594 = vrot.slane %v593, 1
        %v595 = vmax.f32 %v593, %v594
        %v596 = vsub.f32 %v391, %v589
        %v597 = vsub.f32 %v393, %v595
        %v598 = vmul.f32 %v596, 1.442695
        %v599 = vpow.pop %v598
        %v600 = vmul.f32 %v597, 1.442695
        %v601 = vpow.pop %v600
        %v602 = vrot.slane %v599, 4
        %v603 = vadd.f32 %v599, %v602
        %v604 = vrot.slane %v603, 2
        %v605 = vadd.f32 %v603, %v604
        %v606 = vrot.slane %v605, 1
        %v607 = vadd.f32 %v605, %v606
        %v608 = vrot.slane %v601, 4
        %v609 = vadd.f32 %v601, %v608
        %v610 = vrot.slane %v609, 2
        %v611 = vadd.f32 %v609, %v610
        %v612 = vrot.slane %v611, 1
        %v613 = vadd.f32 %v611, %v612
        %v614 = vlog2.pop %v607
        %v615 = vmul.f32 %v614, 0.6931472
        %v616 = vlog2.pop %v613
        %v617 = vmul.f32 %v616, 0.6931472
        %v618 = vadd.f32 %v589, %v615
        %v619 = vadd.f32 %v595, %v617
        %v620 = vsel %vm524, %v391, 0.0
        %v621 = vsel %vm525, %v393, 0.0
        %v622 = vrot.slane %v620, 4
        %v623 = vadd.f32 %v620, %v622
        %v624 = vrot.slane %v623, 2
        %v625 = vadd.f32 %v623, %v624
        %v626 = vrot.slane %v625, 1
        %v627 = vadd.f32 %v625, %v626
        %v628 = vrot.slane %v621, 4
        %v629 = vadd.f32 %v621, %v628
        %v630 = vrot.slane %v629, 2
        %v631 = vadd.f32 %v629, %v630
        %v632 = vrot.slane %v631, 1
        %v633 = vadd.f32 %v631, %v632
        %v634 = vsub.f32 %v618, %v627
        %v635 = vsub.f32 %v619, %v633
        %v638 = vcombine.low %v634, %v635
        %v640 = vunpack.c.l.s4 1966171168
        %v641 = vunpack.c.0.s8 %v640
        %v642 = vlaneseq
        %v643 = vshrl.u32 %v642, 7
        %v644 = vsub.s32 %v641, %v643
        %v645 = vrot.slane %v638, %v644
        %v647 = vunpack.c.l.s4 1966171168
        %v648 = vunpack.c.0.s8 %v647
        %v649 = vlaneseq
        %v650 = vshrl.u32 %v649, 7
        %v651 = vsub.s32 %v648, %v650
        %v652 = vrot.slane %v645, %v651
        %v654 = vsel %vm500, %v652, 0.0
        %v656 = vlaneseq
        %v657 = vshrl.u32 %v656, 7
        %v658 = vsub.s32 0, %v657
        %v659 = vrot.slane %v654, %v658
        %v660 = vlaneseq
        %v661 = vshrl.u32 %v660, 7
        %v662 = vsub.s32 1, %v661
        %v663 = vrot.slane %v654, %v662
        %v666 = vsel %vm501, %v659, 0.0
        %v667 = vsel %vm501, %v663, 0.0
        %v668 = vadd.f32 %v666, %v667
        %669 = vadd.xlane.f32.xlu0 %v668
        %v670 = vpop.xlane.xlu0 %669
        %v671 = vrot.slane %v670, 4
        %v672 = vadd.f32 %v670, %v671
        %v673 = vrot.slane %v672, 2
        %v674 = vadd.f32 %v672, %v673
        %v675 = vrot.slane %v674, 1
        %v676 = vadd.f32 %v674, %v675
        %s677 = vtos %v676
        %v678 = vsel %vm500, 1, 0
        %v679 = vcvt.s32.f32 %v678
        %v681 = vlaneseq
        %v682 = vshrl.u32 %v681, 7
        %v683 = vsub.s32 0, %v682
        %v684 = vrot.slane %v679, %v683
        %v685 = vlaneseq
        %v686 = vshrl.u32 %v685, 7
        %v687 = vsub.s32 1, %v686
        %v688 = vrot.slane %v679, %v687
        %v691 = vsel %vm501, %v684, 0.0
        %v692 = vsel %vm501, %v688, 0.0
        %v693 = vadd.f32 %v691, %v692
        %694 = vadd.xlane.f32.xlu0 %v693
        %v695 = vpop.xlane.xlu0 %694
        %v696 = vrot.slane %v695, 4
        %v697 = vadd.f32 %v695, %v696
        %v698 = vrot.slane %v697, 2
        %v699 = vadd.f32 %v697, %v698
        %v700 = vrot.slane %v699, 1
        %v701 = vadd.f32 %v699, %v700
        %s702 = vtos %v701
        %vm703 = vcmp.eq.f32.partialorder %v387, %v408
        %vm704 = vcmp.eq.f32.partialorder %v389, %v414
        %v705 = vsel %vm703, %v515, 8
        %v706 = vsel %vm704, %v515, 8
        %v707 = vrot.slane %v705, 4
        %vm708 = vcmp.lt.s32.totalorder %v705, %v707
        %v709 = vsel %vm708, %v705, %v707
        %v710 = vrot.slane %v709, 2
        %vm711 = vcmp.lt.s32.totalorder %v709, %v710
        %v712 = vsel %vm711, %v709, %v710
        %v713 = vrot.slane %v712, 1
        %vm714 = vcmp.lt.s32.totalorder %v712, %v713
        %v715 = vsel %vm714, %v712, %v713
        %v716 = vrot.slane %v706, 4
        %vm717 = vcmp.lt.s32.totalorder %v706, %v716
        %v718 = vsel %vm717, %v706, %v716
        %v719 = vrot.slane %v718, 2
        %vm720 = vcmp.lt.s32.totalorder %v718, %v719
        %v721 = vsel %vm720, %v718, %v719
        %v722 = vrot.slane %v721, 1
        %vm723 = vcmp.lt.s32.totalorder %v721, %v722
        %v724 = vsel %vm723, %v721, %v722
        %v725 = vcombine.low %v715, %v724
        %v727 = vunpack.c.l.s4 1966171168
        %v728 = vunpack.c.0.s8 %v727
        %v729 = vlaneseq
        %v730 = vshrl.u32 %v729, 7
        %v731 = vsub.s32 %v728, %v730
        %v732 = vrot.slane %v725, %v731
        %v734 = vunpack.c.l.s4 1966171168
        %v735 = vunpack.c.0.s8 %v734
        %v736 = vlaneseq
        %v737 = vshrl.u32 %v736, 7
        %v738 = vsub.s32 %v735, %v737
        %v739 = vrot.slane %v732, %v738
        %v740 = vlaneseq
        %vm741 = vcmp.ge.s32.totalorder %v740, 0
        %vm742 = vcmp.lt.s32.totalorder %v740, 256
        %vm743 = vmand %vm741, %vm742
        %744 = vst.msk [vmem:[%s270] sm:$0x3] %vm743, %v739
        %vm745 = vcmp.eq.s32.totalorder %v515, 0
        %vm746 = vcmp.eq.s32.totalorder %v515, 1
        %vm747 = vcmp.eq.s32.totalorder %v515, 2
        %vm748 = vcmp.eq.s32.totalorder %v515, 3
        %v749 = vstv %s702
        %v750 = vsel %vm748, %v749, 0.0
        %v751 = vstv %s677
        %v752 = vsel %vm747, %v751, %v750
        %v753 = vstv %s583
        %v754 = vsel %vm746, %v753, %v752
        %v755 = vstv %s513
        %v756 = vsel %vm745, %v755, %v754
        %p757 = scmp.eq.s32.totalorder %s28, 0
        // Predicated region
        $region37: #{tpu_custom_call.1} parent=35 // pred_check
          %p758 = pneg %p757
        $region38: #{tpu_custom_call.1} parent=35 // pred_check_branch
          %760 = sbr.rel (%p758) target = $region40
        $region39: #{tpu_custom_call.1} parent=35 // pred_region
          %761 = vst [vmem:[%s277] sm:$0xff] %v756
        $region40: #{tpu_custom_call.1} parent=35 // pred_fallthru
          _
        %p762 = scmp.ne.s32.totalorder %s28, 0
        // Predicated region
        $region41: #{tpu_custom_call.1} parent=35 // pred_check
          %p763 = pneg %p762
        $region42: #{tpu_custom_call.1} parent=35 // pred_check_branch
          %765 = sbr.rel (%p763) target = $region44
        $region43: #{tpu_custom_call.1} parent=35 // pred_region
          %v766 = vld [vmem:[%s277] sm:$0xff]
          %v767 = vadd.f32 %v766, %v756
          %768 = vst [vmem:[%s277] sm:$0xff] %v767
        $region44: #{tpu_custom_call.1} parent=35 // pred_fallthru
          _
        %s769 = sand.u32 %s143, 1
        %s770 = scalar_lea.sflag [#allocation3], %s769
        %s771 = sand.u32 %s143, 1
        %s772 = smul.addr %s771, 2
        %s773 = scalar_lea.vmem [#allocation2], %s772
        %s774 = sand.u32 %s169, 1
        %s775 = scalar_lea.sflag [#allocation5], %s774
        %s776 = sand.u32 %s169, 1
        %s777 = smul.addr %s776, 8
        %s778 = scalar_lea.vmem [#allocation4], %s777
        // Predicated region
        $region45: #{tpu_custom_call.1} parent=35 // pred_check
          %p779 = pneg %p153
        $region46: #{tpu_custom_call.1} parent=35 // pred_check_branch
          %781 = sbr.rel (%p779) target = $region48
        $region47: #{tpu_custom_call.1} parent=35 // pred_region
          %s782 = smul.u32 2, %s28
          %s784 = ssub.s32 32, 32
          %785 = vsyncadd %s770, %s784
          %s786 = smul.addr %s27, 2
          %s787 = sadd.s32 %s782, %s786
          %s788 = smul.addr %s787, 16
          %s789 = scalar_lea.hbm %s4, %s788
          %s791 = sshll.u32 %s773, 4
          %s792 = int_to_ptr.vmem [resolvable:$true] %s791
          %794 = dma.vmem_to_hbm [thread:$0]  %s792, 32, %s789, %s770
        $region48: #{tpu_custom_call.1} parent=35 // pred_fallthru
          _
        // Predicated region
        $region49: #{tpu_custom_call.1} parent=35 // pred_check
          %p795 = pneg %p179
        $region50: #{tpu_custom_call.1} parent=35 // pred_check_branch
          %797 = sbr.rel (%p795) target = $region52
        $region51: #{tpu_custom_call.1} parent=35 // pred_region
          %s799 = ssub.s32 128, 128
          %800 = vsyncadd %s775, %s799
          %s801 = smul.addr %s27, 128
          %s802 = scalar_lea.hbm %s5, %s801
          %s804 = sshll.u32 %s778, 4
          %s805 = int_to_ptr.vmem [resolvable:$true] %s804
          %807 = dma.vmem_to_hbm [thread:$0]  %s805, 128, %s802, %s775
        $region52: #{tpu_custom_call.1} parent=35 // pred_fallthru
          _
      $region36: #{tpu_custom_call.1} parent=5 // pred_fallthru
        _
      %p808 = scmp.le.s32.totalorder 2, %s18
      // Predicated region
      $region53: #{tpu_custom_call.1} parent=5 // pred_check
        %p809 = pneg %p808
      $region54: #{tpu_custom_call.1} parent=5 // pred_check_branch
        %811 = sbr.rel (%p809) target = $region56
      $region55: #{tpu_custom_call.1} parent=5 // pred_region
        %s812 = ssub.s32 %s18, 2
        // Predicated region
        $region57: #{tpu_custom_call.1} parent=55 // pred_check
          %p813 = pneg %p159
        $region58: #{tpu_custom_call.1} parent=55 // pred_check_branch
          %815 = sbr.rel (%p813) target = $region60
        $region59: #{tpu_custom_call.1} parent=55 // pred_region
          %s816 = sand.u32 %s144, 1
          %s817 = scalar_lea.sflag [#allocation3], %s816
          %s818 = sand.u32 %s144, 1
          %s819 = smul.addr %s818, 2
          %s820 = scalar_lea.vmem [#allocation2], %s819
          %821 = dma.done %s817, 32
        $region60: #{tpu_custom_call.1} parent=55 // pred_fallthru
          _
        // Predicated region
        $region61: #{tpu_custom_call.1} parent=55 // pred_check
          %p822 = pneg %p185
        $region62: #{tpu_custom_call.1} parent=55 // pred_check_branch
          %824 = sbr.rel (%p822) target = $region64
        $region63: #{tpu_custom_call.1} parent=55 // pred_region
          %s825 = sand.u32 %s170, 1
          %s826 = scalar_lea.sflag [#allocation5], %s825
          %s827 = sand.u32 %s170, 1
          %s828 = smul.addr %s827, 8
          %s829 = scalar_lea.vmem [#allocation4], %s828
          %830 = dma.done %s826, 128
        $region64: #{tpu_custom_call.1} parent=55 // pred_fallthru
          _
      $region56: #{tpu_custom_call.1} parent=5 // pred_fallthru
        _
    $region6: #{tpu_custom_call.1} parent=1 // loop_footer
      %s22 = sadd.s32 1, %s18
    $region7: #{tpu_custom_call.1} parent=1 // loop_footer_branch
      %17 = sbr.rel target = $region3
    $region8: #{tpu_custom_call.1} parent=1 // loop_exit
      _
    %831 = vsyncpa [#allocation3], 1
    %s832 = scalar_lea.sflag [#allocation3], 1
    %833 = vsyncpa %s832, 1
    %834 = vsyncpa [#allocation5], 1
    %s835 = scalar_lea.sflag [#allocation5], 1
    %836 = vsyncpa %s835, 1

</llo_original>
